<compile_context>
chip_gen: v7x
topology: tpu7x:2x2x1
jax: 0.10.0
libtpu: 0.0.40
codegen_flags: <defaults>
</compile_context>

<pallas_src>
import jax
import jax.numpy as jnp
from jax.experimental import pallas as pl
from jax.experimental.pallas import tpu as pltpu


def _awl_kernel(p_ref, l_ref, out_ref):
    # p_ref, l_ref: (1, num) f32 in VMEM.  out_ref: (1, 1) f32 in SMEM.
    p = p_ref[...]                       # (1, num) params
    l = l_ref[...]                       # (1, num) per-task losses
    p2 = p * p
    # 0.5 / p^2 * loss  ==  loss / (2 * p^2); log(1 + p^2) matches the torch original.
    # TODO(synk): like the PyTorch original, this is +inf if a param hits 0 exactly.
    term = l / (p2 + p2) + jnp.log(1.0 + p2)
    out_ref[0, 0] = jnp.sum(term)        # scalar reduce lands directly in SMEM


def _awl_forward_pallas(params, loss_vec):
    """params, loss_vec: (num,) f32.  Returns scalar f32."""
    num = params.shape[0]
    p2d = params.reshape(1, num)          # reshape is a layout no-op, not a fusion
    l2d = loss_vec.reshape(1, num)
    out = pl.pallas_call(
        _awl_kernel,
        out_shape=jax.ShapeDtypeStruct((1, 1), jnp.float32),
        in_specs=[
            pl.BlockSpec(memory_space=pltpu.MemorySpace.VMEM),   # full-array block
            pl.BlockSpec(memory_space=pltpu.MemorySpace.VMEM),   # full-array block
        ],
        out_specs=pl.BlockSpec(memory_space=pltpu.MemorySpace.SMEM),
        cost_estimate=pl.CostEstimate(
            flops=6 * num, transcendentals=num, bytes_accessed=8 * num + 4),
    )(p2d, l2d)
    return out[0, 0]


@jax.custom_vjp
def _awl_core(params, loss_vec):
    return _awl_forward_pallas(params, loss_vec)


def _awl_fwd(params, loss_vec):
    return _awl_forward_pallas(params, loss_vec), (params, loss_vec)


def _awl_bwd(res, g):
    # Analytic grads (plain jnp; no backward kernel needed at this size):
    #   dL/dp_i = -l_i / p_i^3 + 2 p_i / (1 + p_i^2)
    #   dL/dl_i = 0.5 / p_i^2
    params, loss_vec = res
    p2 = params * params
    d_params = g * (-loss_vec / (p2 * params) + 2.0 * params / (1.0 + p2))
    d_losses = g * (0.5 / p2)
    return d_params, d_losses


_awl_core.defvjp(_awl_fwd, _awl_bwd)


def automatic_weighted_loss(params, *losses):
    """params: (num,) f32 learnable weights; *losses: num scalar task losses."""
    num = params.shape[0]
    assert len(losses) == num, (len(losses), num)
    loss_vec = jnp.stack(
        [jnp.asarray(x, dtype=jnp.float32).reshape(()) for x in losses])
    return _awl_core(params.astype(jnp.float32), loss_vec)


def _reference(params, losses):
    p2 = params.astype(jnp.float32) ** 2
    return jnp.sum(0.5 / p2 * losses.astype(jnp.float32) + jnp.log(1.0 + p2))


if __name__ == "__main__":
    num = 2

    # Deterministic parameter init (matches torch.ones(num) in __init__).
    params = jnp.ones((num,), dtype=jnp.float32)

    # Deterministic synthetic multi-task scalar losses.
    key = jax.random.PRNGKey(0)
    losses = jax.random.uniform(key, (num,), dtype=jnp.float32, minval=0.5, maxval=3.0)

    result = automatic_weighted_loss(params, losses[0], losses[1])
    result = jax.block_until_ready(result)
    ref = _reference(params, losses)
    assert jnp.allclose(result, ref, rtol=1e-5, atol=1e-5), (result, ref)

    # Second check with non-unit params (exercises the exact-division path).
    k1, k2 = jax.random.split(key)
    params2 = jax.random.uniform(k1, (num,), dtype=jnp.float32, minval=0.5, maxval=2.0)
    losses2 = jax.random.uniform(k2, (num,), dtype=jnp.float32, minval=0.5, maxval=3.0)
    result2 = jax.block_until_ready(
        automatic_weighted_loss(params2, losses2[0], losses2[1]))
    ref2 = _reference(params2, losses2)
    assert jnp.allclose(result2, ref2, rtol=1e-5, atol=1e-5), (result2, ref2)

    # Gradient check through the custom_vjp (params are meant to be trained).
    grad_fn = jax.grad(lambda p: automatic_weighted_loss(p, losses2[0], losses2[1]))
    grad_ref_fn = jax.grad(lambda p: _reference(p, losses2))
    g = jax.block_until_ready(grad_fn(params2))
    g_ref = grad_ref_fn(params2)
    assert jnp.allclose(g, g_ref, rtol=1e-5, atol=1e-5), (g, g_ref)

    print("KERNEL_OK")
</pallas_src>

<mosaic_0001>
module attributes {stable_mosaic.version = 11 : i64} {
  func.func @_awl_kernel(%arg0: memref<1x2xf32, #tpu.memory_space<vmem>>, %arg1: memref<1x2xf32, #tpu.memory_space<vmem>>, %arg2: memref<1x1xf32, #tpu.memory_space<smem>>) attributes {dimension_semantics = [], scalar_prefetch = 0 : i64, scratch_operands = 0 : i64, tpu.core_type = #tpu.core_type<tc>} {
    %c0 = arith.constant 0 : index
    %c0_0 = arith.constant 0 : index
    %0 = vector.load %arg0[%c0, %c0_0] : memref<1x2xf32, #tpu.memory_space<vmem>>, vector<1x2xf32>
    %c0_1 = arith.constant 0 : index
    %c0_2 = arith.constant 0 : index
    %1 = vector.load %arg1[%c0_1, %c0_2] : memref<1x2xf32, #tpu.memory_space<vmem>>, vector<1x2xf32>
    %2 = arith.mulf %0, %0 : vector<1x2xf32>
    %3 = arith.addf %2, %2 : vector<1x2xf32>
    %4 = arith.divf %1, %3 : vector<1x2xf32>
    %cst = arith.constant 1.000000e+00 : f32
    %5 = vector.broadcast %cst : f32 to vector<1x2xf32>
    %6 = arith.addf %5, %2 : vector<1x2xf32>
    %7 = math.log %6 : vector<1x2xf32>
    %8 = arith.addf %4, %7 : vector<1x2xf32>
    %9 = vector.shape_cast %8 : vector<1x2xf32> to vector<1x1x2xf32>
    %cst_3 = arith.constant dense<0.000000e+00> : vector<1xf32>
    %10 = vector.multi_reduction <add>, %9, %cst_3 [1, 2] : vector<1x1x2xf32> to vector<1xf32>
    %11 = vector.shape_cast %10 : vector<1xf32> to vector<1x1x1xf32>
    %12 = vector.extract %11[0, 0, 0] : f32 from vector<1x1x1xf32>
    %c0_4 = arith.constant 0 : index
    %c0_5 = arith.constant 0 : index
    %13 = memref.load %arg2[%c0_4, %c0_5] : memref<1x1xf32, #tpu.memory_space<smem>>
    memref.store %12, %arg2[%c0_4, %c0_5] : memref<1x1xf32, #tpu.memory_space<smem>>
    return
  }
}

</mosaic_0001>

<llo_original>
// kernel: tpu_custom_call.1
$region0: #{tpu_custom_call.1}
  #allocation0 [shape = 'u32[]', space=smem, size = 0x4, offset = 0x4, fixed_abs, tag = 'smem constant byte address 0x4 - core index']
  #allocation1 [shape = 'u32[144,128]{1,0:T(1,128)}', space=vmem, size = 0x12000, scoped, tag = 'internal scratch']
  %s0 = inlined_call_operand.hbm [shape: f32[1,2], index: 0, kind: input, shape index: {}]
  %s1 = inlined_call_operand.vmem [shape: f32[1,2], index: 1, kind: input, shape index: {}]
  %s2 = inlined_call_operand.hbm [shape: f32[1,1], index: 2, kind: output, shape index: {}]
  %s3 = sld [smem:[#allocation0]]
  $region22: #{tpu_custom_call.1} parent=0
    _
  %s5 = ssub.s32 1, %s3
  %s6 = scalar_select 0, %s5, %s3
  $region1: #{tpu_custom_call.1} parent=0
    #allocation2 [shape = 'u8[512]{0}', space=vmem, size = 0x400, scoped, tag = 'input window, operand 0, single buffered']
    #allocation3 [shape = 's32[1]{0}', space=sflag, size = 0x4, scoped, tag = 'scoped memory for tpu_custom_call.1']
    #allocation4 [shape = 's32[1]{0}', space=sflag, size = 0x4, scoped, tag = 'scoped memory for tpu_custom_call.1']
    #allocation5 [shape = 'u8[512]{0}', space=smem, size = 0x200, scoped, tag = 'output window, operand 0, single buffered']
    %7 = vsyncpa [#allocation3], 0
    %8 = vsyncpa [#allocation4], 0
    // Predicated region
    $region2: #{tpu_custom_call.1} parent=1 // pred_check
      _
    $region3: #{tpu_custom_call.1} parent=1 // pred_check_branch
      %10 = sbr.rel (0) target = $region5
    $region4: #{tpu_custom_call.1} parent=1 // pred_region
      %s12 = ssub.s32 16, 16
      %13 = vsyncadd [#allocation3], %s12
      %s15 = sshll.u32 [#allocation2], 4
      %s16 = int_to_ptr.vmem [resolvable:$true] %s15
      %18 = dma.hbm_to_vmem [thread:$0]  %s0, 16, %s16, [#allocation3]
    $region5: #{tpu_custom_call.1} parent=1 // pred_fallthru
      _
    // Predicated region
    $region6: #{tpu_custom_call.1} parent=1 // pred_check
      _
    $region7: #{tpu_custom_call.1} parent=1 // pred_check_branch
      %20 = sbr.rel (0) target = $region9
    $region8: #{tpu_custom_call.1} parent=1 // pred_region
      _
    $region9: #{tpu_custom_call.1} parent=1 // pred_fallthru
      _
    // Predicated region
    $region10: #{tpu_custom_call.1} parent=1 // pred_check
      _
    $region11: #{tpu_custom_call.1} parent=1 // pred_check_branch
      %22 = sbr.rel (0) target = $region13
    $region12: #{tpu_custom_call.1} parent=1 // pred_region
      %23 = dma.done [#allocation3], 16
    $region13: #{tpu_custom_call.1} parent=1 // pred_fallthru
      _
    %v24 = vld [vmem:[#allocation2] sm:$0x1]
    %v25 = vld [vmem:[%s1] sm:$0x1]
    %v26 = vmul.f32 %v24, %v24
    %v27 = vadd.f32 %v26, %v26
    %v28 = vrcp.pop %v27
    %v29 = vmul.f32 %v25, %v28
    %v30 = vadd.f32 %v26, 1.0
    %v31 = vlog2.pop %v30
    %v32 = vmul.f32 %v31, 0.6931472
    %v33 = vadd.f32 %v29, %v32
    %vm34 = vcmask 8192
    %v35 = vsel %vm34, %v33, 0.0
    %36 = vadd.xlane.f32.xlu0 %v35
    %v37 = vpop.xlane.xlu0 %36
    %v38 = vrot.slane %v37, 4
    %v39 = vadd.f32 %v37, %v38
    %v40 = vrot.slane %v39, 2
    %v41 = vadd.f32 %v39, %v40
    %v42 = vrot.slane %v41, 1
    %v43 = vadd.f32 %v41, %v42
    %s44 = vtos %v43
    %s45 = scalar_lea.smem [#allocation5], 0
    %46 = sst [smem:[%s45]] %s44
    // Predicated region
    $region14: #{tpu_custom_call.1} parent=1 // pred_check
      _
    $region15: #{tpu_custom_call.1} parent=1 // pred_check_branch
      %48 = sbr.rel (0) target = $region17
    $region16: #{tpu_custom_call.1} parent=1 // pred_region
      %s50 = ssub.s32 16, 16
      %51 = vsyncadd [#allocation4], %s50
      %54 = dma.smem_to_hbm [#allocation5], 16, %s2, [#allocation4]
    $region17: #{tpu_custom_call.1} parent=1 // pred_fallthru
      _
    // Predicated region
    $region18: #{tpu_custom_call.1} parent=1 // pred_check
      _
    $region19: #{tpu_custom_call.1} parent=1 // pred_check_branch
      %56 = sbr.rel (0) target = $region21
    $region20: #{tpu_custom_call.1} parent=1 // pred_region
      %57 = dma.done [#allocation4], 16
    $region21: #{tpu_custom_call.1} parent=1 // pred_fallthru
      _
    %58 = sfence
    %59 = vsyncpa [#allocation3], 1
    %60 = vsyncpa [#allocation4], 1

</llo_original>
